<compile_context>
chip_gen: v7x
topology: tpu7x:2x2x1
jax: 0.10.0
libtpu: 0.0.40
codegen_flags: <defaults>
</compile_context>

<pallas_src>
import jax
import jax.numpy as jnp
from jax.experimental import pallas as pl
from jax.experimental.pallas import tpu as pltpu


# ----------------------------------------------------------------------------- 
# Kernel body
# -----------------------------------------------------------------------------
def _swiglu_kernel(x_ref, wgu_ref, bgu_ref, wd_ref, bd_ref, o_ref, acc_ref):
    """One (row-tile i, hidden-tile h) grid step."""
    h = pl.program_id(1)

    @pl.when(h == 0)
    def _():
        acc_ref[...] = jnp.zeros_like(acc_ref)

    th = wgu_ref.shape[1] // 2  # static: half of the fused gate|up block

    # Fused gate/up projection: one MXU matmul, native-dtype inputs, f32 accumulate.
    gu = jnp.dot(x_ref[...], wgu_ref[...], preferred_element_type=jnp.float32)
    gu = gu + bgu_ref[...].astype(jnp.float32)

    gate = gu[:, :th]
    up = gu[:, th:]
    # SiLU(gate) * up in f32; sigmoid goes to the EUP slot (free under the MXU).
    gated = gate * jax.nn.sigmoid(gate) * up

    # Down projection for this hidden chunk; cast back to weight dtype for the MXU.
    acc_ref[...] += jnp.dot(
        gated.astype(wd_ref.dtype), wd_ref[...], preferred_element_type=jnp.float32
    )

    @pl.when(h == pl.num_programs(1) - 1)
    def _():
        o_ref[...] = (acc_ref[...] + bd_ref[...].astype(jnp.float32)).astype(o_ref.dtype)


# -----------------------------------------------------------------------------
# Configuration helpers
# -----------------------------------------------------------------------------
_VMEM_CAP_BYTES = {"v5": 100 << 20, "v6": 100 << 20, "v7": 56 << 20}


def _tpu_generation():
    """Best-effort TPU generation detection ('v5' | 'v6' | 'v7' | None)."""
    try:
        kind = jax.devices()[0].device_kind.lower()
    except Exception:
        return None
    for gen in ("v5", "v6", "v7"):
        if gen in kind:
            return gen
    if "7x" in kind:
        return "v7"
    return None


def _fit_tile(total, want, granule):
    """Largest multiple of `granule` <= want that divides `total` (else total)."""
    want = max(granule, min(want, total))
    want -= want % granule
    cand = want
    while cand >= granule:
        if total % cand == 0:
            return cand
        cand -= granule
    return total


def _vmem_limit_bytes(tm, th, dim, x_dtype, w_dtype, out_dtype, io_buffers, gen):
    """Explicit scoped-VMEM budget: double-buffered blocks + acc + headroom."""
    isz = lambda dt: jnp.dtype(dt).itemsize
    xb = 2 if io_buffers is None else max(1, int(io_buffers))
    need = (
        tm * dim * isz(x_dtype) * xb          # x row tile
        + dim * 2 * th * isz(w_dtype) * 2     # [Wg_h | Wu_h]
        + 2 * th * isz(w_dtype) * 2           # [bg_h | bu_h]
        + th * dim * isz(w_dtype) * 2         # Wd_h
        + dim * isz(w_dtype) * 2              # bd
        + tm * dim * isz(out_dtype) * xb      # output tile
        + tm * dim * 4                        # f32 accumulator scratch
    )
    need = int(need * 1.2) + (2 << 20)        # headroom + Mosaic internal scratch
    cap = _VMEM_CAP_BYTES.get(gen, 100 << 20)
    return max(min(need, cap), 16 << 20)


def recommended_config(m, dim, hidden, dtype=jnp.bfloat16, generation=None):
    """Per-generation (tm, th, io_buffers, vmem_limit_bytes) for production shapes.

    v6e: TM=1024/TH=512; v5e: TM=512/TH=512; v7x: TM=512/TH=512 with >=2 row
    tiles (both TensorCores fed) and single-buffered x/out (io_buffers=1).
    Keep TH >= 256 on v6e/v7x (2x256^2 MXU); weights should be bf16 on v7x.
    """
    gen = generation if generation is not None else _tpu_generation()
    if gen == "v6":
        tm_want, th_want, io_buffers = 1024, 512, None
    elif gen == "v5":
        tm_want, th_want, io_buffers = 512, 512, None
    elif gen == "v7":
        tm_want, th_want, io_buffers = 512, 512, 1
    else:
        tm_want, th_want, io_buffers = 512, 512, None

    tm = _fit_tile(m, tm_want, 8)
    th = _fit_tile(hidden, th_want, 128)

    # v7x has 2 TensorCores: make sure the parallel row axis has extent >= 2.
    if gen == "v7" and m // tm < 2 and m >= 16:
        tm = _fit_tile(m, max(8, m // 2), 8)

    vmem = _vmem_limit_bytes(tm, th, dim, dtype, dtype, dtype, io_buffers, gen)
    return tm, th, io_buffers, vmem


def _io_spec(block_shape, index_map, buffers):
    """BlockSpec with optional non-default buffering (x / out on v7x)."""
    if buffers is not None and buffers != 2 and hasattr(pl, "Buffered"):
        try:
            return pl.BlockSpec(block_shape, index_map, pipeline_mode=pl.Buffered(int(buffers)))
        except TypeError:
            pass  # older jax without pipeline_mode -> standard double buffering
    return pl.BlockSpec(block_shape, index_map)


# -----------------------------------------------------------------------------
# Parameter preparation (do ONCE, outside the jitted step)
# -----------------------------------------------------------------------------
def interleave_gate_up(wg, bg, wu, bu, th):
    """Interleave gate/up weights per hidden tile of size `th`.

    Returns wgu (dim, 2*hidden) / bgu (1, 2*hidden) where the columns
    [h*2*th : (h+1)*2*th] hold [Wg_h | Wu_h].  Call this once at parameter-load
    time; `th` must match the tile passed to swiglu_forward.
    """
    dim, hidden = wg.shape
    assert hidden % th == 0, f"hidden {hidden} must be divisible by th={th}"
    n_ht = hidden // th
    wgu = jnp.concatenate(
        [wg.reshape(dim, n_ht, th), wu.reshape(dim, n_ht, th)], axis=2
    ).reshape(dim, 2 * hidden)
    bgu = jnp.concatenate(
        [bg.reshape(1, n_ht, th), bu.reshape(1, n_ht, th)], axis=2
    ).reshape(1, 2 * hidden)
    return wgu, bgu


# -----------------------------------------------------------------------------
# Forward
# -----------------------------------------------------------------------------
def swiglu_forward(x, wgu, bgu, wd, bd, *, tm, th, vmem_limit_bytes=None, io_buffers=None):
    """SwiGLU FFN forward.

    x: (batch, seq, dim).  wgu/bgu: output of interleave_gate_up() with the SAME
    `th`.  wd: (hidden, dim), bd: (1, dim).
    tm: row tile (multiple of 8; 16 for bf16).  th: hidden tile (multiple of 128;
    keep >= 256 on v6e/v7x).  io_buffers=1 single-buffers the x/out blocks (v7x
    VMEM saving).  vmem_limit_bytes is computed from the tiles when None.
    """
    batch, seq, dim = x.shape
    hidden = wd.shape[0]
    m = batch * seq

    tm = min(tm, m)
    th = min(th, hidden)
    assert m % tm == 0, f"rows {m} must be divisible by tm={tm}"
    assert hidden % th == 0, f"hidden {hidden} must be divisible by th={th}"
    assert wgu.shape == (dim, 2 * hidden), "wgu must come from interleave_gate_up()"

    x2d = x.reshape(m, dim)
    n_row_tiles = m // tm

    if vmem_limit_bytes is None:
        vmem_limit_bytes = _vmem_limit_bytes(
            tm, th, dim, x.dtype, wgu.dtype, x.dtype, io_buffers, _tpu_generation()
        )

    # Bytes actually moved from HBM: x + out once, weights once per row tile.
    isz = jnp.dtype(x.dtype).itemsize
    wisz = jnp.dtype(wgu.dtype).itemsize
    weight_bytes = (wgu.size + wd.size) * wisz + (bgu.size + bd.size) * wisz
    bytes_accessed = x2d.size * isz + weight_bytes * n_row_tiles + m * dim * isz

    out2d = pl.pallas_call(
        _swiglu_kernel,
        out_shape=jax.ShapeDtypeStruct((m, dim), x.dtype),
        grid_spec=pltpu.PrefetchScalarGridSpec(
            num_scalar_prefetch=0,
            grid=(m // tm, hidden // th),
            in_specs=[
                _io_spec((tm, dim), lambda i, h: (i, 0), io_buffers),   # x row tile
                pl.BlockSpec((dim, 2 * th), lambda i, h: (0, h)),       # [Wg_h | Wu_h]
                pl.BlockSpec((1, 2 * th), lambda i, h: (0, h)),         # [bg_h | bu_h]
                pl.BlockSpec((th, dim), lambda i, h: (h, 0)),           # Wd_h
                pl.BlockSpec((1, dim), lambda i, h: (0, 0)),            # bd
            ],
            out_specs=_io_spec((tm, dim), lambda i, h: (i, 0), io_buffers),  # resident over h
            scratch_shapes=[pltpu.VMEM((tm, dim), jnp.float32)],        # f32 accumulator
        ),
        compiler_params=pltpu.CompilerParams(
            dimension_semantics=("parallel", "arbitrary"),
            vmem_limit_bytes=int(vmem_limit_bytes),
        ),
        cost_estimate=pl.CostEstimate(
            flops=6 * m * dim * hidden,   # 4*M*dim*H (gate+up) + 2*M*H*dim (down)
            transcendentals=m * hidden,   # sigmoid
            bytes_accessed=int(bytes_accessed),
        ),
    )(x2d, wgu, bgu, wd, bd)

    return out2d.reshape(batch, seq, dim)


# -----------------------------------------------------------------------------
# Parameter init (mimics nn.Linear; weights stored pre-transposed)
# -----------------------------------------------------------------------------
def init_params(key, dim, hidden_dim, dtype=jnp.float32):
    # Note: keep weights bf16 in production when targeting v7x (bf16/fp8-only MXU).
    ks = jax.random.split(key, 6)
    bound_g = 1.0 / (dim ** 0.5)
    bound_d = 1.0 / (hidden_dim ** 0.5)
    wg = jax.random.uniform(ks[0], (dim, hidden_dim), dtype, -bound_g, bound_g)
    bg = jax.random.uniform(ks[1], (1, hidden_dim), dtype, -bound_g, bound_g)
    wu = jax.random.uniform(ks[2], (dim, hidden_dim), dtype, -bound_g, bound_g)
    bu = jax.random.uniform(ks[3], (1, hidden_dim), dtype, -bound_g, bound_g)
    wd = jax.random.uniform(ks[4], (hidden_dim, dim), dtype, -bound_d, bound_d)
    bd = jax.random.uniform(ks[5], (1, dim), dtype, -bound_d, bound_d)
    return wg, bg, wu, bu, wd, bd


if __name__ == "__main__":
    # Small shapes consistent with the module, aligned to the (8, 128) tile
    # geometry so the demo exercises a real (2 x 2) grid with hidden accumulation.
    batch, seq, dim = 2, 8, 128
    hidden = 2 * dim  # 256

    key = jax.random.PRNGKey(0)
    kx, kp = jax.random.split(key)
    x = jax.random.normal(kx, (batch, seq, dim), jnp.float32)
    wg, bg, wu, bu, wd, bd = init_params(kp, dim, hidden)

    # Demo tiles: tm=8, th=128 -> grid (2, 2).  Production: use
    # recommended_config(m, dim, hidden, dtype) and interleave once at load time.
    tm_demo, th_demo = 8, 128
    wgu, bgu = interleave_gate_up(wg, bg, wu, bu, th_demo)  # one-time prep

    out = swiglu_forward(x, wgu, bgu, wd, bd, tm=tm_demo, th=th_demo)
    jax.block_until_ready(out)

    # Plain-JAX reference check.
    gate = x @ wg + bg[0]
    up = x @ wu + bu[0]
    ref = (gate * jax.nn.sigmoid(gate) * up) @ wd + bd[0]
    assert out.shape == (batch, seq, dim)
    assert jnp.allclose(out, ref, atol=1e-4, rtol=1e-4), float(jnp.max(jnp.abs(out - ref)))

    print("KERNEL_OK")
</pallas_src>

<mosaic_0001>
module attributes {stable_mosaic.version = 11 : i64} {
  func.func @_swiglu_kernel(%arg0: i32, %arg1: i32, %arg2: memref<8x128xf32, #tpu.memory_space<vmem>>, %arg3: memref<128x256xf32, #tpu.memory_space<vmem>>, %arg4: memref<1x256xf32, #tpu.memory_space<vmem>>, %arg5: memref<128x128xf32, #tpu.memory_space<vmem>>, %arg6: memref<1x128xf32, #tpu.memory_space<vmem>>, %arg7: memref<8x128xf32, #tpu.memory_space<vmem>>, %arg8: memref<8x128xf32, #tpu.memory_space<vmem>>) attributes {dimension_semantics = [#tpu.dimension_semantics<parallel>, #tpu.dimension_semantics<arbitrary>], iteration_bounds = array<i64: 2, 2>, scalar_prefetch = 0 : i64, scratch_operands = 1 : i64, tpu.core_type = #tpu.core_type<tc>, window_params = [{transform_indices = @transform_0, window_bounds = array<i64: 8, 128>}, {transform_indices = @transform_1, window_bounds = array<i64: 128, 256>}, {transform_indices = @transform_2, window_bounds = array<i64: 1, 256>}, {transform_indices = @transform_3, window_bounds = array<i64: 128, 128>}, {pipeline_mode = #tpu.pipeline_mode<synchronous>, transform_indices = @transform_4, window_bounds = array<i64: 1, 128>}, {transform_indices = @transform_5, window_bounds = array<i64: 8, 128>}]} {
    %c0_i32 = arith.constant 0 : i32
    %0 = arith.cmpi eq, %arg1, %c0_i32 : i32
    %1 = arith.extui %0 : i1 to i32
    %c0_i32_0 = arith.constant 0 : i32
    %2 = arith.cmpi ne, %1, %c0_i32_0 : i32
    scf.if %2 {
      %cst_15 = arith.constant 0.000000e+00 : f32
      %26 = vector.broadcast %cst_15 : f32 to vector<8x128xf32>
      %c0_16 = arith.constant 0 : index
      %c0_17 = arith.constant 0 : index
      %27 = vector.load %arg8[%c0_16, %c0_17] : memref<8x128xf32, #tpu.memory_space<vmem>>, vector<8x128xf32>
      tpu.vector_store %arg8[%c0_16, %c0_17], %26 {strides = array<i32>} : memref<8x128xf32, #tpu.memory_space<vmem>>, vector<8x128xf32>,
    } else {
    }
    %c0 = arith.constant 0 : index
    %c0_1 = arith.constant 0 : index
    %3 = vector.load %arg2[%c0, %c0_1] : memref<8x128xf32, #tpu.memory_space<vmem>>, vector<8x128xf32>
    %c0_2 = arith.constant 0 : index
    %c0_3 = arith.constant 0 : index
    %4 = vector.load %arg3[%c0_2, %c0_3] : memref<128x256xf32, #tpu.memory_space<vmem>>, vector<128x256xf32>
    %cst = arith.constant dense<0.000000e+00> : vector<8x256xf32>
    %5 = tpu.matmul %3, %4, %cst {dimension_numbers = #tpu.dot_dimension_numbers<[1], [0], [0], [1], [0, 0, 1, 1], [], []>} : vector<8x128xf32>, vector<128x256xf32>, vector<8x256xf32> -> vector<8x256xf32>
    %c0_4 = arith.constant 0 : index
    %c0_5 = arith.constant 0 : index
    %6 = vector.load %arg4[%c0_4, %c0_5] : memref<1x256xf32, #tpu.memory_space<vmem>>, vector<1x256xf32>
    %7 = vector.broadcast %6 : vector<1x256xf32> to vector<8x256xf32>
    %8 = arith.addf %5, %7 : vector<8x256xf32>
    %9 = vector.extract_strided_slice %8 {offsets = [0, 0], sizes = [8, 128], strides = [1, 1]} : vector<8x256xf32> to vector<8x128xf32>
    %10 = vector.extract_strided_slice %8 {offsets = [0, 128], sizes = [8, 128], strides = [1, 1]} : vector<8x256xf32> to vector<8x128xf32>
    %11 = arith.negf %9 : vector<8x128xf32>
    %12 = math.exp %11 : vector<8x128xf32>
    %cst_6 = arith.constant 1.000000e+00 : f32
    %13 = vector.broadcast %cst_6 : f32 to vector<8x128xf32>
    %14 = arith.addf %13, %12 : vector<8x128xf32>
    %15 = arith.divf %13, %14 : vector<8x128xf32>
    %16 = arith.mulf %9, %15 : vector<8x128xf32>
    %17 = arith.mulf %16, %10 : vector<8x128xf32>
    %c0_7 = arith.constant 0 : index
    %c0_8 = arith.constant 0 : index
    %18 = vector.load %arg8[%c0_7, %c0_8] : memref<8x128xf32, #tpu.memory_space<vmem>>, vector<8x128xf32>
    %c0_9 = arith.constant 0 : index
    %c0_10 = arith.constant 0 : index
    %19 = vector.load %arg5[%c0_9, %c0_10] : memref<128x128xf32, #tpu.memory_space<vmem>>, vector<128x128xf32>
    %cst_11 = arith.constant dense<0.000000e+00> : vector<8x128xf32>
    %20 = tpu.matmul %17, %19, %cst_11 {dimension_numbers = #tpu.dot_dimension_numbers<[1], [0], [0], [1], [0, 0, 1, 1], [], []>} : vector<8x128xf32>, vector<128x128xf32>, vector<8x128xf32> -> vector<8x128xf32>
    %21 = arith.addf %18, %20 : vector<8x128xf32>
    %c0_12 = arith.constant 0 : index
    %c0_13 = arith.constant 0 : index
    %22 = vector.load %arg8[%c0_12, %c0_13] : memref<8x128xf32, #tpu.memory_space<vmem>>, vector<8x128xf32>
    tpu.vector_store %arg8[%c0_12, %c0_13], %21 {strides = array<i32>} : memref<8x128xf32, #tpu.memory_space<vmem>>, vector<8x128xf32>,
    %c1_i32 = arith.constant 1 : i32
    %23 = arith.cmpi eq, %arg1, %c1_i32 : i32
    %24 = arith.extui %23 : i1 to i32
    %c0_i32_14 = arith.constant 0 : i32
    %25 = arith.cmpi ne, %24, %c0_i32_14 : i32
    scf.if %25 {
      %c0_15 = arith.constant 0 : index
      %c0_16 = arith.constant 0 : index
      %26 = vector.load %arg8[%c0_15, %c0_16] : memref<8x128xf32, #tpu.memory_space<vmem>>, vector<8x128xf32>
      %c0_17 = arith.constant 0 : index
      %c0_18 = arith.constant 0 : index
      %27 = vector.load %arg6[%c0_17, %c0_18] : memref<1x128xf32, #tpu.memory_space<vmem>>, vector<1x128xf32>
      %28 = vector.broadcast %27 : vector<1x128xf32> to vector<8x128xf32>
      %29 = arith.addf %26, %28 : vector<8x128xf32>
      %c0_19 = arith.constant 0 : index
      %c0_20 = arith.constant 0 : index
      %30 = vector.load %arg7[%c0_19, %c0_20] : memref<8x128xf32, #tpu.memory_space<vmem>>, vector<8x128xf32>
      tpu.vector_store %arg7[%c0_19, %c0_20], %29 {strides = array<i32>} : memref<8x128xf32, #tpu.memory_space<vmem>>, vector<8x128xf32>,
    } else {
    }
    return
  }
  func.func @transform_0(%arg0: i32, %arg1: i32) -> (i32, i32) {
    %c0_i32 = arith.constant 0 : i32
    %c0_i32_0 = arith.constant 0 : i32
    return %arg0, %c0_i32 : i32, i32
  }
  func.func @transform_1(%arg0: i32, %arg1: i32) -> (i32, i32) {
    %c0_i32 = arith.constant 0 : i32
    %c0_i32_0 = arith.constant 0 : i32
    return %c0_i32, %arg1 : i32, i32
  }
  func.func @transform_2(%arg0: i32, %arg1: i32) -> (i32, i32) {
    %c0_i32 = arith.constant 0 : i32
    %c0_i32_0 = arith.constant 0 : i32
    return %c0_i32, %arg1 : i32, i32
  }
  func.func @transform_3(%arg0: i32, %arg1: i32) -> (i32, i32) {
    %c0_i32 = arith.constant 0 : i32
    %c0_i32_0 = arith.constant 0 : i32
    return %arg1, %c0_i32 : i32, i32
  }
  func.func @transform_4(%arg0: i32, %arg1: i32) -> (i32, i32) {
    %c0_i32 = arith.constant 0 : i32
    %c0_i32_0 = arith.constant 0 : i32
    %c0_i32_1 = arith.constant 0 : i32
    return %c0_i32, %c0_i32_0 : i32, i32
  }
  func.func @transform_5(%arg0: i32, %arg1: i32) -> (i32, i32) {
    %c0_i32 = arith.constant 0 : i32
    %c0_i32_0 = arith.constant 0 : i32
    return %arg0, %c0_i32 : i32, i32
  }
}

</mosaic_0001>

<llo_original>
// kernel: tpu_custom_call.1
$region0: #{tpu_custom_call.1}
  #allocation0 [shape = 'u32[]', space=smem, size = 0x4, offset = 0x4, fixed_abs, tag = 'smem constant byte address 0x4 - core index']
  #allocation1 [shape = 'u32[144,128]{1,0:T(1,128)}', space=vmem, size = 0x12000, scoped, tag = 'internal scratch']
  #allocation2 [shape = 'f32[8,128]{1,0:T(8,128)}', space=vmem, size = 0x1000, scoped, tag = 'scratch operand']
  %s0 = inlined_call_operand.hbm [shape: f32[16,128], index: 0, kind: input, shape index: {}]
  %s1 = inlined_call_operand.hbm [shape: f32[128,512], index: 1, kind: input, shape index: {}]
  %s2 = inlined_call_operand.vmem [shape: f32[1,512], index: 2, kind: input, shape index: {}]
  %s3 = inlined_call_operand.hbm [shape: f32[256,128], index: 3, kind: input, shape index: {}]
  %s4 = inlined_call_operand.vmem [shape: f32[1,128], index: 4, kind: input, shape index: {}]
  %s5 = inlined_call_operand.hbm [shape: f32[16,128], index: 5, kind: output, shape index: {}]
  %s6 = sld [smem:[#allocation0]]
  $region73: #{tpu_custom_call.1} parent=0
    _
  %s8 = ssub.s32 1, %s6
  %s9 = scalar_select 0, %s8, %s6
  $region1: #{tpu_custom_call.1} parent=0
    #allocation3 [shape = 'u8[8192]{0}', space=vmem, size = 0x2000, scoped, tag = 'input window, operand 0']
    #allocation4 [shape = 's32[2]{0}', space=sflag, size = 0x8, scoped, tag = 'scoped memory for tpu_custom_call.1']
    #allocation5 [shape = 's32[2]{0}', space=sflag, size = 0x8, scoped, tag = 'scoped memory for tpu_custom_call.1']
    #allocation6 [shape = 'u8[262144]{0}', space=vmem, size = 0x40000, scoped, tag = 'input window, operand 1']
    #allocation7 [shape = 's32[2]{0}', space=sflag, size = 0x8, scoped, tag = 'scoped memory for tpu_custom_call.1']
    #allocation8 [shape = 'u8[131072]{0}', space=vmem, size = 0x20000, scoped, tag = 'input window, operand 3']
    #allocation9 [shape = 'u8[8192]{0}', space=vmem, size = 0x2000, scoped, tag = 'output window, operand 0']
    %10 = vsyncpa [#allocation4], 0
    %s11 = scalar_lea.sflag [#allocation4], 1
    %12 = vsyncpa %s11, 0
    %13 = vsyncpa [#allocation7], 0
    %s14 = scalar_lea.sflag [#allocation7], 1
    %15 = vsyncpa %s14, 0
    %16 = vsyncpa [#allocation5], 0
    %s17 = scalar_lea.sflag [#allocation5], 1
    %18 = vsyncpa %s17, 0
    loop: start=0, step=1, limit=6
    $region2: #{tpu_custom_call.1} parent=1 // loop_pre_header
      _
    $region3: #{tpu_custom_call.1} parent=1 // loop_header
      %s20 = sphi 0, %s24
      %p21 = scmp.ge.s32.totalorder %s20, 6
      %s27 = sphi 0, %s39
      %s28 = sphi 0, %s35
      %s29 = sphi 0, %s27
      %s30 = sphi 0, %s28
      %s31 = sphi 0, %s29
      %s32 = sphi 0, %s30
      %s42 = sphi 0, %s44
      %s45 = sphi 0, %s42
      %s46 = sphi 0, %s45
      %s62 = sphi 0, %s46
      %s68 = sphi 0, %s70
      %s71 = sphi 0, %s68
      %s72 = sphi 0, %s71
      %s88 = sphi 0, %s72
      %s94 = sphi 0, %s96
      %s97 = sphi 0, %s94
      %s98 = sphi 0, %s97
      %s114 = sphi 0, %s98
      %s120 = sphi 0, %s122
      %s123 = sphi 0, %s120
      %s124 = sphi 0, %s123
      %s140 = sphi 0, %s124
      %s144 = sphi 0, %s144
      %s146 = sphi 0, %s144
      %s147 = sphi 0, %s146
      %s161 = sphi 0, %s147
      %s167 = sphi 0, %s169
      %s170 = sphi 0, %s167
      %s171 = sphi 0, %s170
      %s187 = sphi 0, %s171
    $region4: #{tpu_custom_call.1} parent=1 // loop_header_branch
      %23 = sbr.rel (%p21) target = $region8
    $region5: #{tpu_custom_call.1} parent=1 // loop_body
      %s25 = ssub.s32 %s20, 1
      %s26 = ssub.s32 %s20, 2
      %s33 = sadd.s32 1, %s28
      %p34 = scmp.ge.s32.totalorder %s33, 2
      %s35 = scalar_select %p34, 0, %s33
      %s36 = sadd.s32 1, %s27
      %s37 = scalar_select %p34, %s36, %s27
      %p38 = scmp.ge.s32.totalorder %s37, 2
      %s39 = scalar_select %p38, 0, %s37
      %s40 = ssub.s32 %s27, %s39
      %p41 = scmp.eq.s32.totalorder %s40, 0
      %s43 = sadd.s32 %s42, 1
      %s44 = scalar_select %p41, %s42, %s43
      %p47 = pneg %p41
      %p48 = scmp.eq.s32.totalorder %s20, 3
      %p49 = por %p47, %p48
      %p50 = scmp.ne.s32.totalorder %s42, %s45
      %p51 = scmp.eq.s32.totalorder %s20, 0
      %p52 = por %p50, %p51
      %p53 = scmp.ne.s32.totalorder %s42, %s45
      %p54 = scmp.eq.s32.totalorder %s25, 3
      %p55 = por %p53, %p54
      %p56 = scmp.ne.s32.totalorder %s45, %s46
      %p57 = scmp.eq.s32.totalorder %s25, 0
      %p58 = por %p56, %p57
      %p59 = scmp.ne.s32.totalorder %s45, %s46
      %p60 = scmp.eq.s32.totalorder %s26, 3
      %p61 = por %p59, %p60
      %p63 = scmp.ne.s32.totalorder %s46, %s62
      %p64 = scmp.eq.s32.totalorder %s26, 0
      %p65 = por %p63, %p64
      %s66 = ssub.s32 %s28, %s35
      %p67 = scmp.eq.s32.totalorder %s66, 0
      %s69 = sadd.s32 %s68, 1
      %s70 = scalar_select %p67, %s68, %s69
      %p73 = pneg %p67
      %p74 = scmp.eq.s32.totalorder %s20, 3
      %p75 = por %p73, %p74
      %p76 = scmp.ne.s32.totalorder %s68, %s71
      %p77 = scmp.eq.s32.totalorder %s20, 0
      %p78 = por %p76, %p77
      %p79 = scmp.ne.s32.totalorder %s68, %s71
      %p80 = scmp.eq.s32.totalorder %s25, 3
      %p81 = por %p79, %p80
      %p82 = scmp.ne.s32.totalorder %s71, %s72
      %p83 = scmp.eq.s32.totalorder %s25, 0
      %p84 = por %p82, %p83
      %p85 = scmp.ne.s32.totalorder %s71, %s72
      %p86 = scmp.eq.s32.totalorder %s26, 3
      %p87 = por %p85, %p86
      %p89 = scmp.ne.s32.totalorder %s72, %s88
      %p90 = scmp.eq.s32.totalorder %s26, 0
      %p91 = por %p89, %p90
      %s92 = ssub.s32 %s28, %s35
      %p93 = scmp.eq.s32.totalorder %s92, 0
      %s95 = sadd.s32 %s94, 1
      %s96 = scalar_select %p93, %s94, %s95
      %p99 = pneg %p93
      %p100 = scmp.eq.s32.totalorder %s20, 3
      %p101 = por %p99, %p100
      %p102 = scmp.ne.s32.totalorder %s94, %s97
      %p103 = scmp.eq.s32.totalorder %s20, 0
      %p104 = por %p102, %p103
      %p105 = scmp.ne.s32.totalorder %s94, %s97
      %p106 = scmp.eq.s32.totalorder %s25, 3
      %p107 = por %p105, %p106
      %p108 = scmp.ne.s32.totalorder %s97, %s98
      %p109 = scmp.eq.s32.totalorder %s25, 0
      %p110 = por %p108, %p109
      %p111 = scmp.ne.s32.totalorder %s97, %s98
      %p112 = scmp.eq.s32.totalorder %s26, 3
      %p113 = por %p111, %p112
      %p115 = scmp.ne.s32.totalorder %s98, %s114
      %p116 = scmp.eq.s32.totalorder %s26, 0
      %p117 = por %p115, %p116
      %s118 = ssub.s32 %s28, %s35
      %p119 = scmp.eq.s32.totalorder %s118, 0
      %s121 = sadd.s32 %s120, 1
      %s122 = scalar_select %p119, %s120, %s121
      %p125 = pneg %p119
      %p126 = scmp.eq.s32.totalorder %s20, 3
      %p127 = por %p125, %p126
      %p128 = scmp.ne.s32.totalorder %s120, %s123
      %p129 = scmp.eq.s32.totalorder %s20, 0
      %p130 = por %p128, %p129
      %p131 = scmp.ne.s32.totalorder %s120, %s123
      %p132 = scmp.eq.s32.totalorder %s25, 3
      %p133 = por %p131, %p132
      %p134 = scmp.ne.s32.totalorder %s123, %s124
      %p135 = scmp.eq.s32.totalorder %s25, 0
      %p136 = por %p134, %p135
      %p137 = scmp.ne.s32.totalorder %s123, %s124
      %p138 = scmp.eq.s32.totalorder %s26, 3
      %p139 = por %p137, %p138
      %p141 = scmp.ne.s32.totalorder %s124, %s140
      %p142 = scmp.eq.s32.totalorder %s26, 0
      %p143 = por %p141, %p142
      %s145 = sadd.s32 %s144, 1
      %p148 = scmp.eq.s32.totalorder %s20, 3
      %p149 = scmp.ne.s32.totalorder %s144, %s146
      %p150 = scmp.eq.s32.totalorder %s20, 0
      %p151 = por %p149, %p150
      %p152 = scmp.ne.s32.totalorder %s144, %s146
      %p153 = scmp.eq.s32.totalorder %s25, 3
      %p154 = por %p152, %p153
      %p155 = scmp.ne.s32.totalorder %s146, %s147
      %p156 = scmp.eq.s32.totalorder %s25, 0
      %p157 = por %p155, %p156
      %p158 = scmp.ne.s32.totalorder %s146, %s147
      %p159 = scmp.eq.s32.totalorder %s26, 3
      %p160 = por %p158, %p159
      %p162 = scmp.ne.s32.totalorder %s147, %s161
      %p163 = scmp.eq.s32.totalorder %s26, 0
      %p164 = por %p162, %p163
      %s165 = ssub.s32 %s27, %s39
      %p166 = scmp.eq.s32.totalorder %s165, 0
      %s168 = sadd.s32 %s167, 1
      %s169 = scalar_select %p166, %s167, %s168
      %p172 = pneg %p166
      %p173 = scmp.eq.s32.totalorder %s20, 3
      %p174 = por %p172, %p173
      %p175 = scmp.ne.s32.totalorder %s167, %s170
      %p176 = scmp.eq.s32.totalorder %s20, 0
      %p177 = por %p175, %p176
      %p178 = scmp.ne.s32.totalorder %s167, %s170
      %p179 = scmp.eq.s32.totalorder %s25, 3
      %p180 = por %p178, %p179
      %p181 = scmp.ne.s32.totalorder %s170, %s171
      %p182 = scmp.eq.s32.totalorder %s25, 0
      %p183 = por %p181, %p182
      %p184 = scmp.ne.s32.totalorder %s170, %s171
      %p185 = scmp.eq.s32.totalorder %s26, 3
      %p186 = por %p184, %p185
      %p188 = scmp.ne.s32.totalorder %s171, %s187
      %p189 = scmp.eq.s32.totalorder %s26, 0
      %p190 = por %p188, %p189
      %p191 = scmp.le.s32.totalorder 1, %s20
      %p192 = scmp.lt.s32.totalorder %s20, 5
      %p193 = pnand %p191, %p192
      %p194 = pneg %p193
      // Predicated region
      $region9: #{tpu_custom_call.1} parent=5 // pred_check
        _
      $region10: #{tpu_custom_call.1} parent=5 // pred_check_branch
        %196 = sbr.rel (%p193) target = $region12
      $region11: #{tpu_custom_call.1} parent=5 // pred_region
        %s197 = ssub.s32 %s20, 1
        // Predicated region
        $region13: #{tpu_custom_call.1} parent=11 // pred_check
          %p198 = pneg %p157
        $region14: #{tpu_custom_call.1} parent=11 // pred_check_branch
          %200 = sbr.rel (%p198) target = $region16
        $region15: #{tpu_custom_call.1} parent=11 // pred_region
          _
        $region16: #{tpu_custom_call.1} parent=11 // pred_fallthru
          _
      $region12: #{tpu_custom_call.1} parent=5 // pred_fallthru
        _
      %p201 = scmp.lt.s32.totalorder %s20, 4
      // Predicated region
      $region17: #{tpu_custom_call.1} parent=5 // pred_check
        %p202 = pneg %p201
      $region18: #{tpu_custom_call.1} parent=5 // pred_check_branch
        %204 = sbr.rel (%p202) target = $region20
      $region19: #{tpu_custom_call.1} parent=5 // pred_region
        // Predicated region
        $region21: #{tpu_custom_call.1} parent=19 // pred_check
          %p205 = pneg %p52
        $region22: #{tpu_custom_call.1} parent=19 // pred_check_branch
          %207 = sbr.rel (%p205) target = $region24
        $region23: #{tpu_custom_call.1} parent=19 // pred_region
          %s208 = sand.u32 %s42, 1
          %s209 = scalar_lea.sflag [#allocation4], %s208
          %s210 = sand.u32 %s42, 1
          %s211 = smul.addr %s210, 8
          %s212 = scalar_lea.vmem [#allocation3], %s211
          %s214 = ssub.s32 128, 128
          %215 = vsyncadd %s209, %s214
          %s216 = smul.addr %s27, 128
          %s217 = scalar_lea.hbm %s0, %s216
          %s219 = sshll.u32 %s212, 4
          %s220 = int_to_ptr.vmem [resolvable:$true] %s219
          %222 = dma.hbm_to_vmem [thread:$0]  %s217, 128, %s220, %s209
        $region24: #{tpu_custom_call.1} parent=19 // pred_fallthru
          _
        // Predicated region
        $region25: #{tpu_custom_call.1} parent=19 // pred_check
          %p223 = pneg %p78
        $region26: #{tpu_custom_call.1} parent=19 // pred_check_branch
          %225 = sbr.rel (%p223) target = $region28
        $region27: #{tpu_custom_call.1} parent=19 // pred_region
          %s226 = sand.u32 %s20, 1
          %s227 = scalar_lea.sflag [#allocation7], %s226
          %s228 = sand.u32 %s68, 1
          %s229 = smul.addr %s228, 256
          %s230 = scalar_lea.vmem [#allocation6], %s229
          %s231 = smul.u32 2, %s28
          %s233 = ssub.s32 4096, 4096
          %234 = vsyncadd %s227, %s233
          %s235 = smul.addr %s231, 128
          %s236 = scalar_lea.hbm %s1, %s235
          %s237 = sshll.u32 %s230, 4
          %s238 = int_to_ptr.vmem [resolvable:$true] %s237
          %243 = dma.hbm_to_vmem [thread:$0]  %s236, 4096, %s238, %s227, 512, 256, 16
        $region28: #{tpu_custom_call.1} parent=19 // pred_fallthru
          _
        // Predicated region
        $region29: #{tpu_custom_call.1} parent=19 // pred_check
          %p244 = pneg %p104
        $region30: #{tpu_custom_call.1} parent=19 // pred_check_branch
          %246 = sbr.rel (%p244) target = $region32
        $region31: #{tpu_custom_call.1} parent=19 // pred_region
          %s247 = smul.u32 2, %s28
          %p248 = scmp.lt.s32.totalorder %s247, 3
          %s249 = scalar_select %p248, %s247, 3
          %s250 = scalar_lea.vmem %s2, %s249
          %s251 = smul.u32 2, %s28
        $region32: #{tpu_custom_call.1} parent=19 // pred_fallthru
          _
        // Predicated region
        $region33: #{tpu_custom_call.1} parent=19 // pred_check
          %p252 = pneg %p130
        $region34: #{tpu_custom_call.1} parent=19 // pred_check_branch
          %254 = sbr.rel (%p252) target = $region36
        $region35: #{tpu_custom_call.1} parent=19 // pred_region
          %s255 = sand.u32 %s20, 1
          %s256 = scalar_lea.sflag [#allocation7], %s255
          %s257 = sand.u32 %s120, 1
          %s258 = smul.addr %s257, 128
          %s259 = scalar_lea.vmem [#allocation8], %s258
          %s260 = smul.u32 16, %s28
          %s262 = ssub.s32 2048, 2048
          %263 = vsyncadd %s256, %s262
          %s264 = smul.addr %s260, 128
          %s265 = scalar_lea.hbm %s3, %s264
          %s266 = sshll.u32 %s259, 4
          %s267 = int_to_ptr.vmem [resolvable:$true] %s266
          %272 = dma.hbm_to_vmem [thread:$0]  %s265, 2048, %s267, %s256, 128, 128, 8
        $region36: #{tpu_custom_call.1} parent=19 // pred_fallthru
          _
      $region20: #{tpu_custom_call.1} parent=5 // pred_fallthru
        _
      %p273 = scmp.le.s32.totalorder 1, %s20
      %p274 = scmp.lt.s32.totalorder %s20, 5
      %p275 = pnand %p273, %p274
      %p276 = pneg %p275
      // Predicated region
      $region37: #{tpu_custom_call.1} parent=5 // pred_check
        _
      $region38: #{tpu_custom_call.1} parent=5 // pred_check_branch
        %278 = sbr.rel (%p275) target = $region40
      $region39: #{tpu_custom_call.1} parent=5 // pred_region
        %s279 = ssub.s32 %s20, 1
        %s280 = sand.u32 %s45, 1
        %s281 = scalar_lea.sflag [#allocation4], %s280
        %s282 = sand.u32 %s45, 1
        %s283 = smul.addr %s282, 8
        %s284 = scalar_lea.vmem [#allocation3], %s283
        // Predicated region
        $region41: #{tpu_custom_call.1} parent=39 // pred_check
          %p285 = pneg %p58
        $region42: #{tpu_custom_call.1} parent=39 // pred_check_branch
          %287 = sbr.rel (%p285) target = $region44
        $region43: #{tpu_custom_call.1} parent=39 // pred_region
          %288 = dma.done %s281, 128
        $region44: #{tpu_custom_call.1} parent=39 // pred_fallthru
          _
        %s289 = sand.u32 %s25, 1
        %s290 = scalar_lea.sflag [#allocation7], %s289
        %s291 = sand.u32 %s71, 1
        %s292 = smul.addr %s291, 256
        %s293 = scalar_lea.vmem [#allocation6], %s292
        // Predicated region
        $region45: #{tpu_custom_call.1} parent=39 // pred_check
          %p294 = pneg %p84
        $region46: #{tpu_custom_call.1} parent=39 // pred_check_branch
          %296 = sbr.rel (%p294) target = $region48
        $region47: #{tpu_custom_call.1} parent=39 // pred_region
          %297 = dma.done %s290, 4096
        $region48: #{tpu_custom_call.1} parent=39 // pred_fallthru
          _
        %s298 = sand.u32 %s25, 1
        %s299 = scalar_lea.sflag [#allocation7], %s298
        %s300 = sand.u32 %s123, 1
        %s301 = smul.addr %s300, 128
        %s302 = scalar_lea.vmem [#allocation8], %s301
        // Predicated region
        $region49: #{tpu_custom_call.1} parent=39 // pred_check
          %p303 = pneg %p136
        $region50: #{tpu_custom_call.1} parent=39 // pred_check_branch
          %305 = sbr.rel (%p303) target = $region52
        $region51: #{tpu_custom_call.1} parent=39 // pred_region
          %306 = dma.done %s299, 2048
        $region52: #{tpu_custom_call.1} parent=39 // pred_fallthru
          _
        %s307 = sand.u32 %s45, 1
        %s308 = scalar_lea.sflag [#allocation4], %s307
        %s309 = sand.u32 %s45, 1
        %s310 = smul.addr %s309, 8
        %s311 = scalar_lea.vmem [#allocation3], %s310
        %p312 = pneg %p58
        %p313 = pneg %p55
        %s314 = sand.u32 %s25, 1
        %s315 = scalar_lea.sflag [#allocation7], %s314
        %s316 = sand.u32 %s71, 1
        %s317 = smul.addr %s316, 256
        %s318 = scalar_lea.vmem [#allocation6], %s317
        %p319 = pneg %p84
        %p320 = pneg %p81
        %s321 = smul.u32 2, %s30
        %p322 = scmp.lt.s32.totalorder %s321, 3
        %s323 = scalar_select %p322, %s321, 3
        %s324 = scalar_lea.vmem %s2, %s323
        %p325 = pneg %p110
        %p326 = pneg %p107
        %s327 = sand.u32 %s25, 1
        %s328 = scalar_lea.sflag [#allocation7], %s327
        %s329 = sand.u32 %s123, 1
        %s330 = smul.addr %s329, 128
        %s331 = scalar_lea.vmem [#allocation8], %s330
        %p332 = pneg %p136
        %p333 = pneg %p133
        %p334 = pneg %p157
        %p335 = pneg %p154
        %p336 = pneg %p183
        %p337 = pneg %p180
        %s338 = sand.u32 %s170, 1
        %s339 = scalar_lea.sflag [#allocation5], %s338
        %s340 = sand.u32 %s170, 1
        %s341 = smul.addr %s340, 8
        %s342 = scalar_lea.vmem [#allocation9], %s341
        %s343 = smul.u32 2, %s30
        %s344 = smul.u32 2, %s30
        %p345 = scmp.lt.s32.totalorder %s344, 3
        %s346 = scalar_select %p345, %s344, 3
        %s347 = scalar_lea.vmem %s2, %s346
        %s348 = smul.u32 2, %s30
        %s349 = smul.u32 16, %s30
        %p350 = scmp.eq.s32.totalorder %s30, 0
        // Predicated region
        $region53: #{tpu_custom_call.1} parent=39 // pred_check
          %p351 = pneg %p350
        $region54: #{tpu_custom_call.1} parent=39 // pred_check_branch
          %353 = sbr.rel (%p351) target = $region56
        $region55: #{tpu_custom_call.1} parent=39 // pred_region
          %354 = vst [vmem:[#allocation2] sm:$0xff] 0.0
        $region56: #{tpu_custom_call.1} parent=39 // pred_fallthru
          _
        %v355 = vld [vmem:[%s284] sm:$0xff]
        %v356 = vld [vmem:[%s293] sm:$0xff]
        %v357 = vld [vmem:[%s293 + $0x8] sm:$0xff]
        %v358 = vld [vmem:[%s293 + $0x10] sm:$0xff]
        %v359 = vld [vmem:[%s293 + $0x18] sm:$0xff]
        %v360 = vld [vmem:[%s293 + $0x20] sm:$0xff]
        %v361 = vld [vmem:[%s293 + $0x28] sm:$0xff]
        %v362 = vld [vmem:[%s293 + $0x30] sm:$0xff]
        %v363 = vld [vmem:[%s293 + $0x38] sm:$0xff]
        %v364 = vld [vmem:[%s293 + $0x40] sm:$0xff]
        %v365 = vld [vmem:[%s293 + $0x48] sm:$0xff]
        %v366 = vld [vmem:[%s293 + $0x50] sm:$0xff]
        %v367 = vld [vmem:[%s293 + $0x58] sm:$0xff]
        %v368 = vld [vmem:[%s293 + $0x60] sm:$0xff]
        %v369 = vld [vmem:[%s293 + $0x68] sm:$0xff]
        %v370 = vld [vmem:[%s293 + $0x70] sm:$0xff]
        %v371 = vld [vmem:[%s293 + $0x78] sm:$0xff]
        %v372 = vld [vmem:[%s293 + $0x80] sm:$0xff]
        %v373 = vld [vmem:[%s293 + $0x88] sm:$0xff]
        %v374 = vld [vmem:[%s293 + $0x90] sm:$0xff]
        %v375 = vld [vmem:[%s293 + $0x98] sm:$0xff]
        %v376 = vld [vmem:[%s293 + $0xa0] sm:$0xff]
        %v377 = vld [vmem:[%s293 + $0xa8] sm:$0xff]
        %v378 = vld [vmem:[%s293 + $0xb0] sm:$0xff]
        %v379 = vld [vmem:[%s293 + $0xb8] sm:$0xff]
        %v380 = vld [vmem:[%s293 + $0xc0] sm:$0xff]
        %v381 = vld [vmem:[%s293 + $0xc8] sm:$0xff]
        %v382 = vld [vmem:[%s293 + $0xd0] sm:$0xff]
        %v383 = vld [vmem:[%s293 + $0xd8] sm:$0xff]
        %v384 = vld [vmem:[%s293 + $0xe0] sm:$0xff]
        %v385 = vld [vmem:[%s293 + $0xe8] sm:$0xff]
        %v386 = vld [vmem:[%s293 + $0xf0] sm:$0xff]
        %v387 = vld [vmem:[%s293 + $0xf8] sm:$0xff]
        %v388 = vld [vmem:[%s347] sm:$0x3]
        %v390 = vlaneseq
        %v391 = vshrl.u32 %v390, 7
        %v392 = vsub.s32 0, %v391
        %v393 = vrot.slane %v388, %v392
        %v394 = vlaneseq
        %v395 = vshrl.u32 %v394, 7
        %v396 = vsub.s32 1, %v395
        %v397 = vrot.slane %v388, %v396
        %400 = vmatprep.subr.mxu0 %v357
        %401 = vmatpush1.msra.mxu0 %v356
        %402 = vmatprep.subr.mxu0 %v359
        %403 = vmatpush1.msra.mxu0 %v358
        %404 = vmatprep.subr.mxu0 %v361
        %405 = vmatpush1.msra.mxu0 %v360
        %406 = vmatprep.subr.mxu0 %v363
        %407 = vmatpush1.msra.mxu0 %v362
        %408 = vmatprep.subr.mxu0 %v365
        %409 = vmatpush1.msra.mxu0 %v364
        %410 = vmatprep.subr.mxu0 %v367
        %411 = vmatpush1.msra.mxu0 %v366
        %412 = vmatprep.subr.mxu0 %v369
        %413 = vmatpush1.msra.mxu0 %v368
        %414 = vmatprep.subr.mxu0 %v371
        %415 = vmatpush1.msra.mxu0 %v370
        %416 = vmatprep.subr.mxu0 %v373
        %417 = vmatpush1.msra.mxu0 %v372
        %418 = vmatprep.subr.mxu0 %v375
        %419 = vmatpush1.msra.mxu0 %v374
        %420 = vmatprep.subr.mxu0 %v377
        %421 = vmatpush1.msra.mxu0 %v376
        %422 = vmatprep.subr.mxu0 %v379
        %423 = vmatpush1.msra.mxu0 %v378
        %424 = vmatprep.subr.mxu0 %v381
        %425 = vmatpush1.msra.mxu0 %v380
        %426 = vmatprep.subr.mxu0 %v383
        %427 = vmatpush1.msra.mxu0 %v382
        %428 = vmatprep.subr.mxu0 %v385
        %429 = vmatpush1.msra.mxu0 %v384
        %430 = vmatprep.subr.mxu0 %v387
        %431 = vmatpush1.msra.mxu0 %v386
        %432 = vmatprep.subr.mxu0 0.0
        %433 = vmatpush1.msra.mxu0 0.0
        %434 = vmatprep.subr.mxu0 0.0
        %435 = vmatpush1.msra.mxu0 0.0
        %436 = vmatprep.subr.mxu0 0.0
        %437 = vmatpush1.msra.mxu0 0.0
        %438 = vmatprep.subr.mxu0 0.0
        %439 = vmatpush1.msra.mxu0 0.0
        %440 = vmatprep.subr.mxu0 0.0
        %441 = vmatpush1.msra.mxu0 0.0
        %442 = vmatprep.subr.mxu0 0.0
        %443 = vmatpush1.msra.mxu0 0.0
        %444 = vmatprep.subr.mxu0 0.0
        %445 = vmatpush1.msra.mxu0 0.0
        %446 = vmatprep.subr.mxu0 0.0
        %447 = vmatpush1.msra.mxu0 0.0
        %448 = vmatprep.subr.mxu0 0.0
        %449 = vmatpush1.msra.mxu0 0.0
        %450 = vmatprep.subr.mxu0 0.0
        %451 = vmatpush1.msra.mxu0 0.0
        %452 = vmatprep.subr.mxu0 0.0
        %453 = vmatpush1.msra.mxu0 0.0
        %454 = vmatprep.subr.mxu0 0.0
        %455 = vmatpush1.msra.mxu0 0.0
        %456 = vmatprep.subr.mxu0 0.0
        %457 = vmatpush1.msra.mxu0 0.0
        %458 = vmatprep.subr.mxu0 0.0
        %459 = vmatpush1.msra.mxu0 0.0
        %460 = vmatprep.subr.mxu0 0.0
        %461 = vmatpush1.msra.mxu0 0.0
        %462 = vmatprep.subr.mxu0 0.0
        %463 = vmatpush1.msra.mxu0 0.0
        %464 = vmatprep.mubr.f32.mxu0 0.0
        %465 = vmatmul.mubr.f32.gmra.mrb[0].mxu0 %v355
        %v466 = vpop.f32.mrb[0].mxu0
        %v467 = vadd.f32 %v393, %v466
        %v468 = vpop.f32.mrb[0].mxu0
        %v469 = vadd.f32 %v397, %v468
        %470 = vdwg.mxu0
        %v471 = vxor.u32 %v467, 2147483648
        %v472 = vmul.f32 %v471, 1.442695
        %v473 = vpow.pop %v472
        %v474 = vadd.f32 %v473, 1.0
        %v475 = vrcp.pop %v474
        %v476 = vmul.f32 1.0, %v475
        %v477 = vmul.f32 %v467, %v476
        %v478 = vmul.f32 %v477, %v469
        %v479 = vld [vmem:[#allocation2] sm:$0xff]
        %v480 = vld [vmem:[%s302] sm:$0xff]
        %v481 = vld [vmem:[%s302 + $0x8] sm:$0xff]
        %v482 = vld [vmem:[%s302 + $0x10] sm:$0xff]
        %v483 = vld [vmem:[%s302 + $0x18] sm:$0xff]
        %v484 = vld [vmem:[%s302 + $0x20] sm:$0xff]
        %v485 = vld [vmem:[%s302 + $0x28] sm:$0xff]
        %v486 = vld [vmem:[%s302 + $0x30] sm:$0xff]
        %v487 = vld [vmem:[%s302 + $0x38] sm:$0xff]
        %v488 = vld [vmem:[%s302 + $0x40] sm:$0xff]
        %v489 = vld [vmem:[%s302 + $0x48] sm:$0xff]
        %v490 = vld [vmem:[%s302 + $0x50] sm:$0xff]
        %v491 = vld [vmem:[%s302 + $0x58] sm:$0xff]
        %v492 = vld [vmem:[%s302 + $0x60] sm:$0xff]
        %v493 = vld [vmem:[%s302 + $0x68] sm:$0xff]
        %v494 = vld [vmem:[%s302 + $0x70] sm:$0xff]
        %v495 = vld [vmem:[%s302 + $0x78] sm:$0xff]
        %496 = vmatprep.subr.mxu0 0.0
        %497 = vmatpush1.msra.mxu0 %v480
        %498 = vmatprep.subr.mxu0 0.0
        %499 = vmatpush1.msra.mxu0 %v481
        %500 = vmatprep.subr.mxu0 0.0
        %501 = vmatpush1.msra.mxu0 %v482
        %502 = vmatprep.subr.mxu0 0.0
        %503 = vmatpush1.msra.mxu0 %v483
        %504 = vmatprep.subr.mxu0 0.0
        %505 = vmatpush1.msra.mxu0 %v484
        %506 = vmatprep.subr.mxu0 0.0
        %507 = vmatpush1.msra.mxu0 %v485
        %508 = vmatprep.subr.mxu0 0.0
        %509 = vmatpush1.msra.mxu0 %v486
        %510 = vmatprep.subr.mxu0 0.0
        %511 = vmatpush1.msra.mxu0 %v487
        %512 = vmatprep.subr.mxu0 0.0
        %513 = vmatpush1.msra.mxu0 %v488
        %514 = vmatprep.subr.mxu0 0.0
        %515 = vmatpush1.msra.mxu0 %v489
        %516 = vmatprep.subr.mxu0 0.0
        %517 = vmatpush1.msra.mxu0 %v490
        %518 = vmatprep.subr.mxu0 0.0
        %519 = vmatpush1.msra.mxu0 %v491
        %520 = vmatprep.subr.mxu0 0.0
        %521 = vmatpush1.msra.mxu0 %v492
        %522 = vmatprep.subr.mxu0 0.0
        %523 = vmatpush1.msra.mxu0 %v493
        %524 = vmatprep.subr.mxu0 0.0
        %525 = vmatpush1.msra.mxu0 %v494
        %526 = vmatprep.subr.mxu0 0.0
        %527 = vmatpush1.msra.mxu0 %v495
        %528 = vmatprep.subr.mxu0 0.0
        %529 = vmatpush1.msra.mxu0 0.0
        %530 = vmatprep.subr.mxu0 0.0
        %531 = vmatpush1.msra.mxu0 0.0
        %532 = vmatprep.subr.mxu0 0.0
        %533 = vmatpush1.msra.mxu0 0.0
        %534 = vmatprep.subr.mxu0 0.0
        %535 = vmatpush1.msra.mxu0 0.0
        %536 = vmatprep.subr.mxu0 0.0
        %537 = vmatpush1.msra.mxu0 0.0
        %538 = vmatprep.subr.mxu0 0.0
        %539 = vmatpush1.msra.mxu0 0.0
        %540 = vmatprep.subr.mxu0 0.0
        %541 = vmatpush1.msra.mxu0 0.0
        %542 = vmatprep.subr.mxu0 0.0
        %543 = vmatpush1.msra.mxu0 0.0
        %544 = vmatprep.subr.mxu0 0.0
        %545 = vmatpush1.msra.mxu0 0.0
        %546 = vmatprep.subr.mxu0 0.0
        %547 = vmatpush1.msra.mxu0 0.0
        %548 = vmatprep.subr.mxu0 0.0
        %549 = vmatpush1.msra.mxu0 0.0
        %550 = vmatprep.subr.mxu0 0.0
        %551 = vmatpush1.msra.mxu0 0.0
        %552 = vmatprep.subr.mxu0 0.0
        %553 = vmatpush1.msra.mxu0 0.0
        %554 = vmatprep.subr.mxu0 0.0
        %555 = vmatpush1.msra.mxu0 0.0
        %556 = vmatprep.subr.mxu0 0.0
        %557 = vmatpush1.msra.mxu0 0.0
        %558 = vmatprep.subr.mxu0 0.0
        %559 = vmatpush1.msra.mxu0 0.0
        %560 = vmatprep.mubr.f32.mxu0 0.0
        %561 = vmatmul.mubr.f32.gmra.mrb[0].mxu0 %v478
        %v562 = vpop.f32.mrb[0].mxu0
        %v563 = vadd.f32 0.0, %v562
        %v564 = vpop.f32.mrb[0].mxu0
        %565 = vdwg.mxu0
        %v566 = vadd.f32 %v479, %v563
        %567 = vst [vmem:[#allocation2] sm:$0xff] %v566
        %p568 = scmp.eq.s32.totalorder %s30, 1
        // Predicated region
        $region57: #{tpu_custom_call.1} parent=39 // pred_check
          %p569 = pneg %p568
        $region58: #{tpu_custom_call.1} parent=39 // pred_check_branch
          %571 = sbr.rel (%p569) target = $region60
        $region59: #{tpu_custom_call.1} parent=39 // pred_region
          %v572 = vld [vmem:[#allocation2] sm:$0xff]
          %v573 = vld [vmem:[%s4] sm:$0x1]
          %v575 = vlaneseq
          %v576 = vshrl.u32 %v575, 7
          %v577 = vsub.s32 0, %v576
          %v578 = vrot.slane %v573, %v577
          %v580 = vadd.f32 %v572, %v578
          %581 = vst [vmem:[%s342] sm:$0xff] %v580
        $region60: #{tpu_custom_call.1} parent=39 // pred_fallthru
          _
        %s582 = sand.u32 %s170, 1
        %s583 = scalar_lea.sflag [#allocation5], %s582
        %s584 = sand.u32 %s170, 1
        %s585 = smul.addr %s584, 8
        %s586 = scalar_lea.vmem [#allocation9], %s585
        // Predicated region
        $region61: #{tpu_custom_call.1} parent=39 // pred_check
          %p587 = pneg %p180
        $region62: #{tpu_custom_call.1} parent=39 // pred_check_branch
          %589 = sbr.rel (%p587) target = $region64
        $region63: #{tpu_custom_call.1} parent=39 // pred_region
          %s591 = ssub.s32 128, 128
          %592 = vsyncadd %s583, %s591
          %s593 = smul.addr %s29, 128
          %s594 = scalar_lea.hbm %s5, %s593
          %s596 = sshll.u32 %s586, 4
          %s597 = int_to_ptr.vmem [resolvable:$true] %s596
          %599 = dma.vmem_to_hbm [thread:$0]  %s597, 128, %s594, %s583
        $region64: #{tpu_custom_call.1} parent=39 // pred_fallthru
          _
      $region40: #{tpu_custom_call.1} parent=5 // pred_fallthru
        _
      %p600 = scmp.le.s32.totalorder 2, %s20
      // Predicated region
      $region65: #{tpu_custom_call.1} parent=5 // pred_check
        %p601 = pneg %p600
      $region66: #{tpu_custom_call.1} parent=5 // pred_check_branch
        %603 = sbr.rel (%p601) target = $region68
      $region67: #{tpu_custom_call.1} parent=5 // pred_region
        %s604 = ssub.s32 %s20, 2
        // Predicated region
        $region69: #{tpu_custom_call.1} parent=67 // pred_check
          %p605 = pneg %p186
        $region70: #{tpu_custom_call.1} parent=67 // pred_check_branch
          %607 = sbr.rel (%p605) target = $region72
        $region71: #{tpu_custom_call.1} parent=67 // pred_region
          %s608 = sand.u32 %s171, 1
          %s609 = scalar_lea.sflag [#allocation5], %s608
          %s610 = sand.u32 %s171, 1
          %s611 = smul.addr %s610, 8
          %s612 = scalar_lea.vmem [#allocation9], %s611
          %613 = dma.done %s609, 128
        $region72: #{tpu_custom_call.1} parent=67 // pred_fallthru
          _
      $region68: #{tpu_custom_call.1} parent=5 // pred_fallthru
        _
    $region6: #{tpu_custom_call.1} parent=1 // loop_footer
      %s24 = sadd.s32 1, %s20
    $region7: #{tpu_custom_call.1} parent=1 // loop_footer_branch
      %19 = sbr.rel target = $region3
    $region8: #{tpu_custom_call.1} parent=1 // loop_exit
      _
    %614 = vsyncpa [#allocation4], 1
    %s615 = scalar_lea.sflag [#allocation4], 1
    %616 = vsyncpa %s615, 1
    %617 = vsyncpa [#allocation7], 1
    %s618 = scalar_lea.sflag [#allocation7], 1
    %619 = vsyncpa %s618, 1
    %620 = vsyncpa [#allocation5], 1
    %s621 = scalar_lea.sflag [#allocation5], 1
    %622 = vsyncpa %s621, 1

</llo_original>
